<compile_context>
chip_gen: v6e
topology: v6e:2x2x1
jax: 0.10.0
libtpu: 0.0.40
codegen_flags: <defaults>
</compile_context>

<pallas_src>
import functools

import jax
import jax.numpy as jnp
from jax.experimental import pallas as pl
from jax.experimental.pallas import tpu as pltpu

# Hyperparameters implied by the module (small synthetic sizes).
STATES = 8
HIDDEN_SIZE = 32
ACTIONS = 4
BATCH = 2

# Lane-padded internal sizes (full 128-lane vregs, unmasked stores).
HIDDEN_PAD = 128
OUT_PAD = 128


def _round_up(n, m):
    return ((n + m - 1) // m) * m


def _is_dual_tensorcore_chip():
    """Best-effort detection of a 2-TensorCore-per-chip part (v7x)."""
    try:
        kind = jax.devices()[0].device_kind.lower()
    except Exception:  # e.g. no device visible at trace time
        return False
    return ("v7" in kind) or ("7x" in kind)


_DUAL_TC = _is_dual_tensorcore_chip()


def _ac_kernel(x_ref, w1_ref, b1_ref, w23_ref, b23_ref, out_ref):
    # Hidden layer: relu(x @ W1 + b1)   -> [TB, HIDDEN_PAD]
    x = x_ref[...]
    h = jnp.dot(x, w1_ref[...], preferred_element_type=jnp.float32) + b1_ref[...]
    h = jnp.maximum(h, 0.0)

    # Fused heads: one MXU matmul.  Cols 0:ACTIONS = action logits, col ACTIONS
    # = state value, remaining padded cols are exactly zero.
    z = jnp.dot(h, w23_ref[...], preferred_element_type=jnp.float32) + b23_ref[...]

    lane = jax.lax.broadcasted_iota(jnp.int32, z.shape, 1)
    is_act = lane < ACTIONS

    # Masked softmax over the action lanes only (full-width vreg ops).
    neg_big = jnp.float32(-1e30)                      # avoid -inf edge cases
    masked = jnp.where(is_act, z, neg_big)
    m = jnp.max(masked, axis=-1, keepdims=True)
    e = jnp.where(is_act, jnp.exp(masked - m), 0.0)   # padded lanes exactly 0
    denom = jnp.sum(e, axis=-1, keepdims=True)
    probs = e / denom                                 # exact: sum(probs) == 1

    # Single lane-dense store: [TB, 128] = probs | value | zeros.
    out_ref[...] = jnp.where(lane == ACTIONS, z, probs)


def _pick_tile(B, tile_b):
    """Pick (tile rows, padded batch, n_tiles).

    Single-TC chips (v5e/v6e): 1 grid step if the padded batch fits one tile
    (nothing to pipeline against; weights are resident anyway).
    Dual-TC chips (v7x): force an even number (>=2) of tiles so the "parallel"
    batch axis shards across both TensorCores.
    """
    b8 = _round_up(max(B, 1), 8)
    want_tiles = 2 if (_DUAL_TC and b8 >= 16) else 1
    tb = _round_up(pl.cdiv(b8, want_tiles), 8)
    tb = min(tb, tile_b)           # cap: ~1.1 KiB/row double-buffered, well
    tb = max(tb, 8)                # under scoped VMEM on v5e/v6e/v7x at 1024
    b_pad = _round_up(b8, tb)
    return tb, b_pad, b_pad // tb


@functools.partial(jax.jit, static_argnames=("tile_b",))
def network_forward(x, packed_params, tile_b=1024):
    """x: [B, STATES] float32. Returns (action_prob [B, ACTIONS], state_values [B, 1])."""
    w1p, b1p, w23, b23 = packed_params
    B = x.shape[0]

    tb, b_pad, n_tiles = _pick_tile(B, tile_b)
    if b_pad != B:
        x = jnp.pad(x, ((0, b_pad - B), (0, 0)))

    cost = pl.CostEstimate(
        flops=2 * b_pad * (STATES * HIDDEN_PAD + HIDDEN_PAD * OUT_PAD),
        transcendentals=b_pad * OUT_PAD,
        bytes_accessed=4 * (x.size + w1p.size + b1p.size + w23.size + b23.size
                            + b_pad * OUT_PAD),
    )

    slab = pl.pallas_call(
        _ac_kernel,
        out_shape=jax.ShapeDtypeStruct((b_pad, OUT_PAD), jnp.float32),
        grid=(n_tiles,),
        in_specs=[
            pl.BlockSpec((tb, STATES), lambda i: (i, 0)),            # x tile
            pl.BlockSpec((STATES, HIDDEN_PAD), lambda i: (0, 0)),    # W1 (resident)
            pl.BlockSpec((1, HIDDEN_PAD), lambda i: (0, 0)),         # b1 (resident)
            pl.BlockSpec((HIDDEN_PAD, OUT_PAD), lambda i: (0, 0)),   # fused W2|W3
            pl.BlockSpec((1, OUT_PAD), lambda i: (0, 0)),            # fused b2|b3
        ],
        out_specs=pl.BlockSpec((tb, OUT_PAD), lambda i: (i, 0)),
        compiler_params=pltpu.CompilerParams(
            dimension_semantics=("parallel",),
        ),
        cost_estimate=cost,
    )(x, w1p, b1p, w23, b23)

    # Slice the slab once: cols 0:ACTIONS are probs, col ACTIONS is the value.
    head = slab[:B, :ACTIONS + 1]
    action_prob = head[:, :ACTIONS]
    state_values = head[:, ACTIONS:ACTIONS + 1]
    return action_prob, state_values


def init_params(key):
    """Deterministic parameter init (uniform, like PyTorch Linear default ranges).

    Weights are stored [in_features, out_features] so forward is x @ W + b."""
    k1, k2, k3, k4, k5, k6 = jax.random.split(key, 6)

    def lin(kw, kb, fan_in, fan_out):
        bound = 1.0 / jnp.sqrt(fan_in)
        w = jax.random.uniform(kw, (fan_in, fan_out), jnp.float32, -bound, bound)
        b = jax.random.uniform(kb, (1, fan_out), jnp.float32, -bound, bound)
        return w, b

    w1, b1 = lin(k1, k2, STATES, HIDDEN_SIZE)
    w2, b2 = lin(k3, k4, HIDDEN_SIZE, ACTIONS)
    w3, b3 = lin(k5, k6, HIDDEN_SIZE, 1)
    return (w1, b1, w2, b2, w3, b3)


def pack_params(params):
    """Zero-pad + fuse parameters into lane-dense kernel operands (one-time cost)."""
    w1, b1, w2, b2, w3, b3 = params
    w1p = jnp.zeros((STATES, HIDDEN_PAD), jnp.float32).at[:, :HIDDEN_SIZE].set(w1)
    b1p = jnp.zeros((1, HIDDEN_PAD), jnp.float32).at[:, :HIDDEN_SIZE].set(b1)

    w23 = jnp.zeros((HIDDEN_PAD, OUT_PAD), jnp.float32)
    w23 = w23.at[:HIDDEN_SIZE, :ACTIONS].set(w2)
    w23 = w23.at[:HIDDEN_SIZE, ACTIONS:ACTIONS + 1].set(w3)
    b23 = jnp.zeros((1, OUT_PAD), jnp.float32)
    b23 = b23.at[:, :ACTIONS].set(b2)
    b23 = b23.at[:, ACTIONS:ACTIONS + 1].set(b3)
    return w1p, b1p, w23, b23


def reference_forward(x, params):
    w1, b1, w2, b2, w3, b3 = params
    h = jax.nn.relu(x @ w1 + b1)
    probs = jax.nn.softmax(h @ w2 + b2, axis=-1)
    values = h @ w3 + b3
    return probs, values


if __name__ == "__main__":
    key = jax.random.PRNGKey(0)
    kx, kp, kx2 = jax.random.split(key, 3)
    params = init_params(kp)
    packed = pack_params(params)

    # Small case matching the module's implied shapes (batch=2, STATES=8).
    x = jax.random.normal(kx, (BATCH, STATES), jnp.float32)
    probs, values = network_forward(x, packed)
    jax.block_until_ready((probs, values))

    ref_probs, ref_values = reference_forward(x, params)
    assert probs.shape == (BATCH, ACTIONS)
    assert values.shape == (BATCH, 1)
    assert jnp.allclose(probs, ref_probs, atol=1e-4, rtol=1e-4)
    assert jnp.allclose(values, ref_values, atol=1e-4, rtol=1e-4)
    assert jnp.allclose(jnp.sum(probs, axis=-1), 1.0, atol=1e-4)

    # Larger batch exercising the bigger tile / multi-core tiling path.
    xb = jax.random.normal(kx2, (1024, STATES), jnp.float32)
    pb, vb = network_forward(xb, packed)
    jax.block_until_ready((pb, vb))
    rpb, rvb = reference_forward(xb, params)
    assert jnp.allclose(pb, rpb, atol=1e-4, rtol=1e-4)
    assert jnp.allclose(vb, rvb, atol=1e-4, rtol=1e-4)
    assert jnp.allclose(jnp.sum(pb, axis=-1), 1.0, atol=1e-4)

    print("KERNEL_OK")
</pallas_src>

<mosaic_0001>
module attributes {stable_mosaic.version = 11 : i64} {
  func.func @_ac_kernel(%arg0: i32, %arg1: memref<8x8xf32, #tpu.memory_space<vmem>>, %arg2: memref<8x128xf32, #tpu.memory_space<vmem>>, %arg3: memref<1x128xf32, #tpu.memory_space<vmem>>, %arg4: memref<128x128xf32, #tpu.memory_space<vmem>>, %arg5: memref<1x128xf32, #tpu.memory_space<vmem>>, %arg6: memref<8x128xf32, #tpu.memory_space<vmem>>) attributes {dimension_semantics = [#tpu.dimension_semantics<parallel>], iteration_bounds = array<i64: 1>, scalar_prefetch = 0 : i64, scratch_operands = 0 : i64, tpu.core_type = #tpu.core_type<tc>, window_params = [{transform_indices = @transform_0, window_bounds = array<i64: 8, 8>}, {pipeline_mode = #tpu.pipeline_mode<synchronous>, transform_indices = @transform_1, window_bounds = array<i64: 8, 128>}, {pipeline_mode = #tpu.pipeline_mode<synchronous>, transform_indices = @transform_2, window_bounds = array<i64: 1, 128>}, {pipeline_mode = #tpu.pipeline_mode<synchronous>, transform_indices = @transform_3, window_bounds = array<i64: 128, 128>}, {pipeline_mode = #tpu.pipeline_mode<synchronous>, transform_indices = @transform_4, window_bounds = array<i64: 1, 128>}, {transform_indices = @transform_5, window_bounds = array<i64: 8, 128>}]} {
    %c0 = arith.constant 0 : index
    %c0_0 = arith.constant 0 : index
    %0 = vector.load %arg1[%c0, %c0_0] : memref<8x8xf32, #tpu.memory_space<vmem>>, vector<8x8xf32>
    %c0_1 = arith.constant 0 : index
    %c0_2 = arith.constant 0 : index
    %1 = vector.load %arg2[%c0_1, %c0_2] : memref<8x128xf32, #tpu.memory_space<vmem>>, vector<8x128xf32>
    %cst = arith.constant dense<0.000000e+00> : vector<8x128xf32>
    %2 = tpu.matmul %0, %1, %cst {dimension_numbers = #tpu.dot_dimension_numbers<[1], [0], [0], [1], [0, 0, 1, 1], [], []>} : vector<8x8xf32>, vector<8x128xf32>, vector<8x128xf32> -> vector<8x128xf32>
    %c0_3 = arith.constant 0 : index
    %c0_4 = arith.constant 0 : index
    %3 = vector.load %arg3[%c0_3, %c0_4] : memref<1x128xf32, #tpu.memory_space<vmem>>, vector<1x128xf32>
    %4 = vector.broadcast %3 : vector<1x128xf32> to vector<8x128xf32>
    %5 = arith.addf %2, %4 : vector<8x128xf32>
    %cst_5 = arith.constant 0.000000e+00 : f32
    %6 = vector.broadcast %cst_5 : f32 to vector<8x128xf32>
    %7 = arith.maximumf %5, %6 : vector<8x128xf32>
    %c0_6 = arith.constant 0 : index
    %c0_7 = arith.constant 0 : index
    %8 = vector.load %arg4[%c0_6, %c0_7] : memref<128x128xf32, #tpu.memory_space<vmem>>, vector<128x128xf32>
    %cst_8 = arith.constant dense<0.000000e+00> : vector<8x128xf32>
    %9 = tpu.matmul %7, %8, %cst_8 {dimension_numbers = #tpu.dot_dimension_numbers<[1], [0], [0], [1], [0, 0, 1, 1], [], []>} : vector<8x128xf32>, vector<128x128xf32>, vector<8x128xf32> -> vector<8x128xf32>
    %c0_9 = arith.constant 0 : index
    %c0_10 = arith.constant 0 : index
    %10 = vector.load %arg5[%c0_9, %c0_10] : memref<1x128xf32, #tpu.memory_space<vmem>>, vector<1x128xf32>
    %11 = vector.broadcast %10 : vector<1x128xf32> to vector<8x128xf32>
    %12 = arith.addf %9, %11 : vector<8x128xf32>
    %13 = tpu.iota {dimensions = array<i32: 1>} : vector<8x128xi32>
    %c4_i32 = arith.constant 4 : i32
    %14 = vector.broadcast %c4_i32 : i32 to vector<8x128xi32>
    %15 = arith.cmpi slt, %13, %14 : vector<8x128xi32>
    %cst_11 = arith.constant -1.000000e+30 : f32
    %16 = vector.broadcast %cst_11 : f32 to vector<8x128xf32>
    %17 = arith.select %15, %12, %16 : vector<8x128xi1>, vector<8x128xf32>
    %cst_12 = arith.constant dense<0xFF800000> : vector<8xf32>
    %18 = vector.multi_reduction <maximumf>, %17, %cst_12 [1] : vector<8x128xf32> to vector<8xf32>
    %19 = vector.shape_cast %18 : vector<8xf32> to vector<8x1xf32>
    %20 = vector.broadcast %19 : vector<8x1xf32> to vector<8x128xf32>
    %21 = arith.subf %17, %20 : vector<8x128xf32>
    %22 = math.exp %21 : vector<8x128xf32>
    %cst_13 = arith.constant 0.000000e+00 : f32
    %23 = vector.broadcast %cst_13 : f32 to vector<8x128xf32>
    %24 = arith.select %15, %22, %23 : vector<8x128xi1>, vector<8x128xf32>
    %cst_14 = arith.constant dense<0.000000e+00> : vector<8xf32>
    %25 = vector.multi_reduction <add>, %24, %cst_14 [1] : vector<8x128xf32> to vector<8xf32>
    %26 = vector.shape_cast %25 : vector<8xf32> to vector<8x1xf32>
    %27 = vector.broadcast %26 : vector<8x1xf32> to vector<8x128xf32>
    %28 = arith.divf %24, %27 : vector<8x128xf32>
    %c4_i32_15 = arith.constant 4 : i32
    %29 = vector.broadcast %c4_i32_15 : i32 to vector<8x128xi32>
    %30 = arith.cmpi eq, %13, %29 : vector<8x128xi32>
    %31 = arith.select %30, %12, %28 : vector<8x128xi1>, vector<8x128xf32>
    %c0_16 = arith.constant 0 : index
    %c0_17 = arith.constant 0 : index
    %32 = vector.load %arg6[%c0_16, %c0_17] : memref<8x128xf32, #tpu.memory_space<vmem>>, vector<8x128xf32>
    tpu.vector_store %arg6[%c0_16, %c0_17], %31 {strides = array<i32>} : memref<8x128xf32, #tpu.memory_space<vmem>>, vector<8x128xf32>,
    return
  }
  func.func @transform_0(%arg0: i32) -> (i32, i32) {
    %c0_i32 = arith.constant 0 : i32
    %c0_i32_0 = arith.constant 0 : i32
    return %arg0, %c0_i32 : i32, i32
  }
  func.func @transform_1(%arg0: i32) -> (i32, i32) {
    %c0_i32 = arith.constant 0 : i32
    %c0_i32_0 = arith.constant 0 : i32
    %c0_i32_1 = arith.constant 0 : i32
    return %c0_i32, %c0_i32_0 : i32, i32
  }
  func.func @transform_2(%arg0: i32) -> (i32, i32) {
    %c0_i32 = arith.constant 0 : i32
    %c0_i32_0 = arith.constant 0 : i32
    %c0_i32_1 = arith.constant 0 : i32
    return %c0_i32, %c0_i32_0 : i32, i32
  }
  func.func @transform_3(%arg0: i32) -> (i32, i32) {
    %c0_i32 = arith.constant 0 : i32
    %c0_i32_0 = arith.constant 0 : i32
    %c0_i32_1 = arith.constant 0 : i32
    return %c0_i32, %c0_i32_0 : i32, i32
  }
  func.func @transform_4(%arg0: i32) -> (i32, i32) {
    %c0_i32 = arith.constant 0 : i32
    %c0_i32_0 = arith.constant 0 : i32
    %c0_i32_1 = arith.constant 0 : i32
    return %c0_i32, %c0_i32_0 : i32, i32
  }
  func.func @transform_5(%arg0: i32) -> (i32, i32) {
    %c0_i32 = arith.constant 0 : i32
    %c0_i32_0 = arith.constant 0 : i32
    return %arg0, %c0_i32 : i32, i32
  }
}

</mosaic_0001>

<llo_original>
// kernel: network_forward.1
$region0: #{network_forward.1}
  #allocation0 [shape = 'u32[]', space=smem, size = 0x4, offset = 0x4, fixed_abs, tag = 'smem constant byte address 0x4 - core index']
  #allocation1 [shape = 'u32[144,128]{1,0:T(1,128)}', space=vmem, size = 0x12000, scoped, tag = 'internal scratch']
  %s0 = inlined_call_operand.vmem [shape: f32[8,8], index: 0, kind: input, shape index: {}]
  %s1 = inlined_call_operand.vmem [shape: f32[8,128], index: 1, kind: input, shape index: {}]
  %s2 = inlined_call_operand.vmem [shape: f32[1,128], index: 2, kind: input, shape index: {}]
  %s3 = inlined_call_operand.hbm [shape: f32[128,128], index: 3, kind: input, shape index: {}]
  %s4 = inlined_call_operand.vmem [shape: f32[1,128], index: 4, kind: input, shape index: {}]
  %s5 = inlined_call_operand.vmem [shape: f32[8,128], index: 5, kind: output, shape index: {}]
  %s6 = sld [smem:[#allocation0]]
  $region34: #{network_forward.1} parent=0
    _
  %s8 = ssub.s32 1, %s6
  %s9 = scalar_select 0, %s8, %s6
  $region1: #{network_forward.1} parent=0
    #allocation2 [shape = 'u8[65536]{0}', space=vmem, size = 0x10000, scoped, tag = 'input window, operand 3, single buffered']
    #allocation3 [shape = 's32[1]{0}', space=sflag, size = 0x4, scoped, tag = 'scoped memory for network_forward.1']
    %10 = vsyncpa [#allocation3], 0
    // Predicated region
    $region2: #{network_forward.1} parent=1 // pred_check
      _
    $region3: #{network_forward.1} parent=1 // pred_check_branch
      %12 = sbr.rel (0) target = $region5
    $region4: #{network_forward.1} parent=1 // pred_region
      _
    $region5: #{network_forward.1} parent=1 // pred_fallthru
      _
    // Predicated region
    $region6: #{network_forward.1} parent=1 // pred_check
      _
    $region7: #{network_forward.1} parent=1 // pred_check_branch
      %14 = sbr.rel (0) target = $region9
    $region8: #{network_forward.1} parent=1 // pred_region
      _
    $region9: #{network_forward.1} parent=1 // pred_fallthru
      _
    // Predicated region
    $region10: #{network_forward.1} parent=1 // pred_check
      _
    $region11: #{network_forward.1} parent=1 // pred_check_branch
      %16 = sbr.rel (0) target = $region13
    $region12: #{network_forward.1} parent=1 // pred_region
      _
    $region13: #{network_forward.1} parent=1 // pred_fallthru
      _
    // Predicated region
    $region14: #{network_forward.1} parent=1 // pred_check
      _
    $region15: #{network_forward.1} parent=1 // pred_check_branch
      %18 = sbr.rel (0) target = $region17
    $region16: #{network_forward.1} parent=1 // pred_region
      %s20 = ssub.s32 2048, 2048
      %21 = vsyncadd [#allocation3], %s20
      %s22 = sshll.u32 [#allocation2], 4
      %s23 = int_to_ptr.vmem [resolvable:$true] %s22
      %28 = dma.hbm_to_vmem [thread:$0]  %s3, 2048, %s23, [#allocation3], 128, 128, 8
    $region17: #{network_forward.1} parent=1 // pred_fallthru
      _
    // Predicated region
    $region18: #{network_forward.1} parent=1 // pred_check
      _
    $region19: #{network_forward.1} parent=1 // pred_check_branch
      %30 = sbr.rel (0) target = $region21
    $region20: #{network_forward.1} parent=1 // pred_region
      _
    $region21: #{network_forward.1} parent=1 // pred_fallthru
      _
    // Predicated region
    $region22: #{network_forward.1} parent=1 // pred_check
      _
    $region23: #{network_forward.1} parent=1 // pred_check_branch
      %32 = sbr.rel (0) target = $region25
    $region24: #{network_forward.1} parent=1 // pred_region
      %33 = dma.done [#allocation3], 2048
    $region25: #{network_forward.1} parent=1 // pred_fallthru
      _
    %v34 = vld [vmem:[%s0] sm:$0xff]
    %v35 = vld [vmem:[%s1] sm:$0xff]
    %v36 = vld [vmem:[%s2] sm:$0x1]
    %v38 = vlaneseq
    %v39 = vshrl.u32 %v38, 7
    %v40 = vsub.s32 0, %v39
    %v41 = vrot.slane %v36, %v40
    %vm43 = vcmask 64512
    %v45 = vsel %vm43, %v34, 0
    %47 = vmatprep.subr.mxu0 0.0
    %48 = vmatpush1.msra.mxu0 0.0
    %49 = vmatprep.subr.mxu0 0.0
    %50 = vmatpush1.msra.mxu0 0.0
    %51 = vmatprep.subr.mxu0 0.0
    %52 = vmatpush1.msra.mxu0 0.0
    %53 = vmatprep.subr.mxu0 0.0
    %54 = vmatpush1.msra.mxu0 0.0
    %55 = vmatprep.subr.mxu0 0.0
    %56 = vmatpush1.msra.mxu0 0.0
    %57 = vmatprep.subr.mxu0 0.0
    %58 = vmatpush1.msra.mxu0 0.0
    %59 = vmatprep.subr.mxu0 0.0
    %60 = vmatpush1.msra.mxu0 0.0
    %61 = vmatprep.subr.mxu0 0.0
    %62 = vmatpush1.msra.mxu0 0.0
    %63 = vmatprep.subr.mxu0 0.0
    %64 = vmatpush1.msra.mxu0 0.0
    %65 = vmatprep.subr.mxu0 0.0
    %66 = vmatpush1.msra.mxu0 0.0
    %67 = vmatprep.subr.mxu0 0.0
    %68 = vmatpush1.msra.mxu0 0.0
    %69 = vmatprep.subr.mxu0 0.0
    %70 = vmatpush1.msra.mxu0 0.0
    %71 = vmatprep.subr.mxu0 0.0
    %72 = vmatpush1.msra.mxu0 0.0
    %73 = vmatprep.subr.mxu0 0.0
    %74 = vmatpush1.msra.mxu0 0.0
    %75 = vmatprep.subr.mxu0 0.0
    %76 = vmatpush1.msra.mxu0 0.0
    %77 = vmatprep.subr.mxu0 0.0
    %78 = vmatpush1.msra.mxu0 %v35
    %79 = vmatprep.subr.mxu0 0.0
    %80 = vmatpush2.msra.mxu0 0.0
    %81 = vmatprep.subr.mxu0 0.0
    %82 = vmatpush2.msra.mxu0 0.0
    %83 = vmatprep.subr.mxu0 0.0
    %84 = vmatpush2.msra.mxu0 0.0
    %85 = vmatprep.subr.mxu0 0.0
    %86 = vmatpush2.msra.mxu0 0.0
    %87 = vmatprep.subr.mxu0 0.0
    %88 = vmatpush2.msra.mxu0 0.0
    %89 = vmatprep.subr.mxu0 0.0
    %90 = vmatpush2.msra.mxu0 0.0
    %91 = vmatprep.subr.mxu0 0.0
    %92 = vmatpush2.msra.mxu0 0.0
    %93 = vmatprep.subr.mxu0 0.0
    %94 = vmatpush2.msra.mxu0 0.0
    %95 = vmatprep.subr.mxu0 0.0
    %96 = vmatpush2.msra.mxu0 0.0
    %97 = vmatprep.subr.mxu0 0.0
    %98 = vmatpush2.msra.mxu0 0.0
    %99 = vmatprep.subr.mxu0 0.0
    %100 = vmatpush2.msra.mxu0 0.0
    %101 = vmatprep.subr.mxu0 0.0
    %102 = vmatpush2.msra.mxu0 0.0
    %103 = vmatprep.subr.mxu0 0.0
    %104 = vmatpush2.msra.mxu0 0.0
    %105 = vmatprep.subr.mxu0 0.0
    %106 = vmatpush2.msra.mxu0 0.0
    %107 = vmatprep.subr.mxu0 0.0
    %108 = vmatpush2.msra.mxu0 0.0
    %109 = vmatprep.subr.mxu0 0.0
    %110 = vmatpush2.msra.mxu0 0.0
    %111 = vmatprep.mubr.f32.mxu0 0.0
    %112 = vmatmul.mubr.f32.gmra.mxu0 %v45
    %v113 = vpop.f32.mrf.mxu0
    %v114 = vadd.f32 %v41, %v113
    %v115 = vpop.f32.mrf.mxu0
    %116 = vdwg.mxu0
    %v117 = vmax.f32 %v114, 0.0
    %v118 = vld [vmem:[#allocation2] sm:$0xff]
    %v119 = vld [vmem:[#allocation2 + $0x8] sm:$0xff]
    %v120 = vld [vmem:[#allocation2 + $0x10] sm:$0xff]
    %v121 = vld [vmem:[#allocation2 + $0x18] sm:$0xff]
    %v122 = vld [vmem:[#allocation2 + $0x20] sm:$0xff]
    %v123 = vld [vmem:[#allocation2 + $0x28] sm:$0xff]
    %v124 = vld [vmem:[#allocation2 + $0x30] sm:$0xff]
    %v125 = vld [vmem:[#allocation2 + $0x38] sm:$0xff]
    %v126 = vld [vmem:[#allocation2 + $0x40] sm:$0xff]
    %v127 = vld [vmem:[#allocation2 + $0x48] sm:$0xff]
    %v128 = vld [vmem:[#allocation2 + $0x50] sm:$0xff]
    %v129 = vld [vmem:[#allocation2 + $0x58] sm:$0xff]
    %v130 = vld [vmem:[#allocation2 + $0x60] sm:$0xff]
    %v131 = vld [vmem:[#allocation2 + $0x68] sm:$0xff]
    %v132 = vld [vmem:[#allocation2 + $0x70] sm:$0xff]
    %v133 = vld [vmem:[#allocation2 + $0x78] sm:$0xff]
    %v134 = vld [vmem:[%s4] sm:$0x1]
    %v136 = vlaneseq
    %v137 = vshrl.u32 %v136, 7
    %v138 = vsub.s32 0, %v137
    %v139 = vrot.slane %v134, %v138
    %141 = vmatprep.subr.mxu0 0.0
    %142 = vmatpush1.msra.mxu0 %v133
    %143 = vmatprep.subr.mxu0 0.0
    %144 = vmatpush1.msra.mxu0 %v132
    %145 = vmatprep.subr.mxu0 0.0
    %146 = vmatpush1.msra.mxu0 %v131
    %147 = vmatprep.subr.mxu0 0.0
    %148 = vmatpush1.msra.mxu0 %v130
    %149 = vmatprep.subr.mxu0 0.0
    %150 = vmatpush1.msra.mxu0 %v129
    %151 = vmatprep.subr.mxu0 0.0
    %152 = vmatpush1.msra.mxu0 %v128
    %153 = vmatprep.subr.mxu0 0.0
    %154 = vmatpush1.msra.mxu0 %v127
    %155 = vmatprep.subr.mxu0 0.0
    %156 = vmatpush1.msra.mxu0 %v126
    %157 = vmatprep.subr.mxu0 0.0
    %158 = vmatpush1.msra.mxu0 %v125
    %159 = vmatprep.subr.mxu0 0.0
    %160 = vmatpush1.msra.mxu0 %v124
    %161 = vmatprep.subr.mxu0 0.0
    %162 = vmatpush1.msra.mxu0 %v123
    %163 = vmatprep.subr.mxu0 0.0
    %164 = vmatpush1.msra.mxu0 %v122
    %165 = vmatprep.subr.mxu0 0.0
    %166 = vmatpush1.msra.mxu0 %v121
    %167 = vmatprep.subr.mxu0 0.0
    %168 = vmatpush1.msra.mxu0 %v120
    %169 = vmatprep.subr.mxu0 0.0
    %170 = vmatpush1.msra.mxu0 %v119
    %171 = vmatprep.subr.mxu0 0.0
    %172 = vmatpush1.msra.mxu0 %v118
    %173 = vmatprep.subr.mxu0 0.0
    %174 = vmatpush2.msra.mxu0 0.0
    %175 = vmatprep.subr.mxu0 0.0
    %176 = vmatpush2.msra.mxu0 0.0
    %177 = vmatprep.subr.mxu0 0.0
    %178 = vmatpush2.msra.mxu0 0.0
    %179 = vmatprep.subr.mxu0 0.0
    %180 = vmatpush2.msra.mxu0 0.0
    %181 = vmatprep.subr.mxu0 0.0
    %182 = vmatpush2.msra.mxu0 0.0
    %183 = vmatprep.subr.mxu0 0.0
    %184 = vmatpush2.msra.mxu0 0.0
    %185 = vmatprep.subr.mxu0 0.0
    %186 = vmatpush2.msra.mxu0 0.0
    %187 = vmatprep.subr.mxu0 0.0
    %188 = vmatpush2.msra.mxu0 0.0
    %189 = vmatprep.subr.mxu0 0.0
    %190 = vmatpush2.msra.mxu0 0.0
    %191 = vmatprep.subr.mxu0 0.0
    %192 = vmatpush2.msra.mxu0 0.0
    %193 = vmatprep.subr.mxu0 0.0
    %194 = vmatpush2.msra.mxu0 0.0
    %195 = vmatprep.subr.mxu0 0.0
    %196 = vmatpush2.msra.mxu0 0.0
    %197 = vmatprep.subr.mxu0 0.0
    %198 = vmatpush2.msra.mxu0 0.0
    %199 = vmatprep.subr.mxu0 0.0
    %200 = vmatpush2.msra.mxu0 0.0
    %201 = vmatprep.subr.mxu0 0.0
    %202 = vmatpush2.msra.mxu0 0.0
    %203 = vmatprep.subr.mxu0 0.0
    %204 = vmatpush2.msra.mxu0 0.0
    %205 = vmatprep.mubr.f32.mxu0 0.0
    %206 = vmatmul.mubr.f32.gmra.mxu0 %v117
    %v207 = vpop.f32.mrf.mxu0
    %v208 = vadd.f32 %v139, %v207
    %v209 = vpop.f32.mrf.mxu0
    %210 = vdwg.mxu0
    %v211 = vlaneseq
    %v212 = vand.u32 %v211, 127
    %vm213 = vcmp.lt.s32.totalorder %v212, 4
    %v214 = vsel %vm213, %v208, -1e+30
    %215 = vmax.xlane.f32.xlu0 %v214
    %v216 = vpop.xlane.xlu0 %215
    %v217 = vsub.f32 %v214, %v216
    %v218 = vmul.f32 %v217, 1.442695
    %v219 = vpow.pop %v218
    %v220 = vsel %vm213, %v219, 0.0
    %221 = vadd.xlane.f32.xlu0 %v220
    %v222 = vpop.xlane.xlu0 %221
    %v223 = vrcp.pop %v222
    %v224 = vmul.f32 %v220, %v223
    %vm225 = vcmp.eq.s32.totalorder %v212, 4
    %v226 = vsel %vm225, %v208, %v224
    %227 = vst [vmem:[%s5] sm:$0xff] %v226
    // Predicated region
    $region26: #{network_forward.1} parent=1 // pred_check
      _
    $region27: #{network_forward.1} parent=1 // pred_check_branch
      %229 = sbr.rel (0) target = $region29
    $region28: #{network_forward.1} parent=1 // pred_region
      _
    $region29: #{network_forward.1} parent=1 // pred_fallthru
      _
    // Predicated region
    $region30: #{network_forward.1} parent=1 // pred_check
      _
    $region31: #{network_forward.1} parent=1 // pred_check_branch
      %231 = sbr.rel (0) target = $region33
    $region32: #{network_forward.1} parent=1 // pred_region
      _
    $region33: #{network_forward.1} parent=1 // pred_fallthru
      _
    %232 = vsyncpa [#allocation3], 1

</llo_original>
